<compile_context>
chip_gen: v7x
topology: tpu7x:2x2x1
jax: 0.10.0
libtpu: 0.0.40
codegen_flags: <defaults>
</compile_context>

<pallas_src>
import functools

import jax
import jax.numpy as jnp
from jax.experimental import pallas as pl
from jax.experimental.pallas import tpu as pltpu


def _round_up(x, m):
    return ((x + m - 1) // m) * m


def _attn_kernel(h_ref, enc_ref, out_ref, e_ref, *, L, tile_L, nL, chunk):
    """h_ref: (tile_B, H), enc_ref: (tile_L, tile_B, H), out_ref: (tile_B, L),
    e_ref: (nL, tile_B, tile_L) f32 scratch — persistent across the L grid axis."""
    l_idx = pl.program_id(1)
    h = h_ref[...]                                    # native dtype; no full-tile upcast

    n_full = tile_L // chunk
    rem = tile_L - n_full * chunk

    def score(off, size):
        # Multiply in the native dtype on the VPU; widen to f32 only at the H (lane)
        # reduction, so the f32 working set is chunk-sized (decoupled from tile_L).
        enc_c = enc_ref[pl.ds(off, size), :, :]              # (size, tile_B, H)
        prod = (enc_c * h[None, :, :]).astype(jnp.float32)
        part = jnp.sum(prod, axis=-1)                        # (size, tile_B)
        return pltpu.einshape("lb->bl", part)                # (tile_B, size) — XLU flip

    # Static chunk loop: offsets are compile-time constants, so every scratch store is a
    # static, lane-dense slice (lane axis = tile_L) and no dynamic lane indexing is needed.
    for c in range(n_full):
        off = c * chunk
        e_ref[l_idx, :, off:off + chunk] = score(off, chunk)
    if rem > 0:
        off = n_full * chunk
        e_ref[l_idx, :, off:off + rem] = score(off, rem)

    # Finalize once every L-tile of this B-tile has been scored.
    @pl.when(l_idx == nL - 1)
    def _finalize():
        if nL > 1:
            # Stitch the per-L-tile slabs along the lane axis: (tile_B, L_pad).
            E = jnp.concatenate([e_ref[i] for i in range(nL)], axis=-1)
        else:
            E = e_ref[0]
        L_pad = nL * tile_L
        if L_pad != L:                                # static branch: ragged L tail
            lane = jax.lax.broadcasted_iota(jnp.int32, E.shape, 1)
            E = jnp.where(lane < L, E, -jnp.inf)
        m = jnp.max(E, axis=-1, keepdims=True)
        p = jnp.exp(E - m)
        s = jnp.sum(p, axis=-1, keepdims=True)
        probs = p / s                                 # exact divide: once per B-tile, off the critical path
        if L_pad != L:
            probs = probs[:, :L]
        out_ref[...] = probs.astype(out_ref.dtype)    # one lane-dense (tile_B, L) store


def attn_forward(hidden, encoder_outputs):
    """hidden: (1, B, H), encoder_outputs: (L, B, H)  ->  (B, 1, L)."""
    L, B, H = encoder_outputs.shape
    assert hidden.shape == (1, B, H)
    hidden2d = hidden[0]                   # size-1 leading-axis squeeze (no HBM pass over enc)

    dtype = encoder_outputs.dtype
    itemsize = jnp.dtype(dtype).itemsize
    out_dtype = dtype
    out_itemsize = jnp.dtype(out_dtype).itemsize

    # ---- batch tiling -------------------------------------------------------
    ENC_BLOCK_BUDGET = 6 << 20             # per enc block; the pipeline double-buffers it
    if B <= 8:
        tile_B = B                         # full extent (allowed even if < 8)
    else:
        tile_B = _round_up(B, 8)
        if B >= 16:                        # keep >= 2 B-tiles so the "parallel" axis can
            tile_B = _round_up(pl.cdiv(B, 2), 8)   # feed a second TensorCore (v7x)
        tile_B = min(tile_B, 256)          # DMA contiguity saturates well before this
        # keep >= 8 enc rows per block inside the enc budget
        tile_B = min(tile_B, max(8, (ENC_BLOCK_BUDGET // (8 * H * itemsize)) // 8 * 8))
        # resident per-B-tile state (f32 scores + double-buffered output) scales with L
        tile_B = min(tile_B, max(8, ((24 << 20) // max(1, L * (4 + 2 * out_itemsize))) // 8 * 8))
        if tile_B >= B:
            tile_B = B
    nB = pl.cdiv(B, tile_B)

    # ---- L tiling / in-kernel chunking -------------------------------------
    # chunk bounds the per-iteration f32 product temp (~1 MiB), independent of tile_L.
    chunk = max(8, min(512, ((1 << 20) // max(1, tile_B * H * 4)) // 8 * 8))
    rows = ENC_BLOCK_BUDGET // max(1, tile_B * H * itemsize)
    if rows >= L:
        tile_L = L
    else:
        tile_L = max(chunk, (rows // chunk) * chunk)
    chunk = min(chunk, tile_L)
    nL = pl.cdiv(L, tile_L)

    # ---- explicit VMEM budget (scoped defaults are only 16/32 MiB) ---------
    vmem_est = (
        2 * tile_L * tile_B * H * itemsize       # enc block, double-buffered
        + 2 * tile_B * H * itemsize              # hidden block, double-buffered
        + 2 * tile_B * L * out_itemsize          # output block, double-buffered
        + nL * tile_B * tile_L * 4               # f32 score scratch
        + 3 * chunk * tile_B * H * 4             # in-kernel f32 chunk temps (headroom)
    )
    # Cap at 48 MiB so the same budget also fits v7x's 64 MiB physical VMEM.
    vmem_limit = int(min(max(vmem_est + (8 << 20), 32 << 20), 48 << 20))

    kernel = functools.partial(_attn_kernel, L=L, tile_L=tile_L, nL=nL, chunk=chunk)

    cost = pl.CostEstimate(
        flops=2 * B * L * H,
        transcendentals=B * L,
        bytes_accessed=itemsize * (L * B * H + B * H) + out_itemsize * B * L,
    )

    out = pl.pallas_call(
        kernel,
        out_shape=jax.ShapeDtypeStruct((B, L), out_dtype),
        grid=(nB, nL),
        in_specs=[
            pl.BlockSpec((tile_B, H), lambda b, l: (b, 0)),             # hidden  (B, H)
            pl.BlockSpec((tile_L, tile_B, H), lambda b, l: (l, b, 0)),  # enc     (L, B, H)
        ],
        out_specs=pl.BlockSpec((tile_B, L), lambda b, l: (b, 0)),       # resident over L
        scratch_shapes=[pltpu.VMEM((nL, tile_B, tile_L), jnp.float32)],
        compiler_params=pltpu.CompilerParams(
            dimension_semantics=("parallel", "arbitrary"),
            vmem_limit_bytes=vmem_limit,
        ),
        cost_estimate=cost,
    )(hidden2d, encoder_outputs)

    return out[:, None, :]                                              # (B, 1, L)


def _reference(hidden, encoder_outputs):
    # Pure-JAX reference mirroring the PyTorch forward.
    energies = jnp.sum(hidden * encoder_outputs, axis=2)      # (L, B)
    energies = energies.T                                     # (B, L)
    return jax.nn.softmax(energies, axis=1)[:, None, :]       # (B, 1, L)


if __name__ == "__main__":
    # Small shapes consistent with the module's forward: seq L=8, batch B=2, hidden H=32.
    key = jax.random.PRNGKey(0)
    k1, k2 = jax.random.split(key)
    L, B, H = 8, 2, 32
    hidden = jax.random.normal(k1, (1, B, H), dtype=jnp.float32)
    encoder_outputs = jax.random.normal(k2, (L, B, H), dtype=jnp.float32)

    out = attn_forward(hidden, encoder_outputs)
    out = jax.block_until_ready(out)

    ref = _reference(hidden, encoder_outputs)
    assert out.shape == (B, 1, L), out.shape
    # Exact (non-approx) softmax divide: tight tolerance vs the pure-JAX reference.
    assert jnp.allclose(out, ref, atol=1e-5, rtol=1e-5), "mismatch vs reference"

    print("KERNEL_OK")
</pallas_src>

<mosaic_0001>
module attributes {stable_mosaic.version = 11 : i64} {
  func.func @_attn_kernel(%arg0: i32, %arg1: i32, %arg2: memref<2x32xf32, #tpu.memory_space<vmem>>, %arg3: memref<8x2x32xf32, #tpu.memory_space<vmem>>, %arg4: memref<2x8xf32, #tpu.memory_space<vmem>>, %arg5: memref<1x2x8xf32, #tpu.memory_space<vmem>>) attributes {dimension_semantics = [#tpu.dimension_semantics<parallel>, #tpu.dimension_semantics<arbitrary>], iteration_bounds = array<i64: 1, 1>, scalar_prefetch = 0 : i64, scratch_operands = 1 : i64, tpu.core_type = #tpu.core_type<tc>, window_params = [{transform_indices = @transform_0, window_bounds = array<i64: 2, 32>}, {transform_indices = @transform_1, window_bounds = array<i64: 8, 2, 32>}, {transform_indices = @transform_2, window_bounds = array<i64: 2, 8>}]} {
    %c0 = arith.constant 0 : index
    %c0_0 = arith.constant 0 : index
    %0 = vector.load %arg2[%c0, %c0_0] : memref<2x32xf32, #tpu.memory_space<vmem>>, vector<2x32xf32>
    %c0_1 = arith.constant 0 : index
    %c0_2 = arith.constant 0 : index
    %c0_3 = arith.constant 0 : index
    %1 = vector.load %arg3[%c0_1, %c0_2, %c0_3] : memref<8x2x32xf32, #tpu.memory_space<vmem>>, vector<8x2x32xf32>
    %2 = vector.shape_cast %0 : vector<2x32xf32> to vector<1x2x32xf32>
    %3 = vector.broadcast %2 : vector<1x2x32xf32> to vector<8x2x32xf32>
    %4 = arith.mulf %1, %3 : vector<8x2x32xf32>
    %cst = arith.constant dense<0.000000e+00> : vector<8x2xf32>
    %5 = vector.multi_reduction <add>, %4, %cst [2] : vector<8x2x32xf32> to vector<8x2xf32>
    %6 = tpu.transpose %5, [1, 0] : vector<8x2xf32> -> vector<2x8xf32>
    %7 = arith.index_cast %arg1 : i32 to index
    %c0_4 = arith.constant 0 : index
    %c0_5 = arith.constant 0 : index
    %8 = vector.load %arg5[%7, %c0_4, %c0_5] : memref<1x2x8xf32, #tpu.memory_space<vmem>>, vector<1x2x8xf32>
    %9 = vector.shape_cast %8 : vector<1x2x8xf32> to vector<2x8xf32>
    %10 = vector.shape_cast %6 : vector<2x8xf32> to vector<1x2x8xf32>
    tpu.vector_store %arg5[%7, %c0_4, %c0_5], %10 {strides = array<i32>} : memref<1x2x8xf32, #tpu.memory_space<vmem>>, vector<1x2x8xf32>,
    %c0_i32 = arith.constant 0 : i32
    %11 = arith.cmpi eq, %arg1, %c0_i32 : i32
    %12 = arith.extui %11 : i1 to i32
    %c0_i32_6 = arith.constant 0 : i32
    %13 = arith.cmpi ne, %12, %c0_i32_6 : i32
    scf.if %13 {
      %c0_7 = arith.constant 0 : index
      %c0_8 = arith.constant 0 : index
      %c0_9 = arith.constant 0 : index
      %14 = vector.load %arg5[%c0_7, %c0_8, %c0_9] : memref<1x2x8xf32, #tpu.memory_space<vmem>>, vector<1x2x8xf32>
      %15 = vector.shape_cast %14 : vector<1x2x8xf32> to vector<2x8xf32>
      %cst_10 = arith.constant dense<0xFF800000> : vector<2xf32>
      %16 = vector.multi_reduction <maximumf>, %15, %cst_10 [1] : vector<2x8xf32> to vector<2xf32>
      %17 = vector.shape_cast %16 : vector<2xf32> to vector<2x1xf32>
      %18 = vector.broadcast %17 : vector<2x1xf32> to vector<2x8xf32>
      %19 = arith.subf %15, %18 : vector<2x8xf32>
      %20 = math.exp %19 : vector<2x8xf32>
      %cst_11 = arith.constant dense<0.000000e+00> : vector<2xf32>
      %21 = vector.multi_reduction <add>, %20, %cst_11 [1] : vector<2x8xf32> to vector<2xf32>
      %22 = vector.shape_cast %21 : vector<2xf32> to vector<2x1xf32>
      %23 = vector.broadcast %22 : vector<2x1xf32> to vector<2x8xf32>
      %24 = arith.divf %20, %23 : vector<2x8xf32>
      %c0_12 = arith.constant 0 : index
      %c0_13 = arith.constant 0 : index
      %25 = vector.load %arg4[%c0_12, %c0_13] : memref<2x8xf32, #tpu.memory_space<vmem>>, vector<2x8xf32>
      tpu.vector_store %arg4[%c0_12, %c0_13], %24 {strides = array<i32>} : memref<2x8xf32, #tpu.memory_space<vmem>>, vector<2x8xf32>,
    } else {
    }
    return
  }
  func.func @transform_0(%arg0: i32, %arg1: i32) -> (i32, i32) {
    %c0_i32 = arith.constant 0 : i32
    %c0_i32_0 = arith.constant 0 : i32
    return %arg0, %c0_i32 : i32, i32
  }
  func.func @transform_1(%arg0: i32, %arg1: i32) -> (i32, i32, i32) {
    %c0_i32 = arith.constant 0 : i32
    %c0_i32_0 = arith.constant 0 : i32
    return %arg1, %arg0, %c0_i32 : i32, i32, i32
  }
  func.func @transform_2(%arg0: i32, %arg1: i32) -> (i32, i32) {
    %c0_i32 = arith.constant 0 : i32
    %c0_i32_0 = arith.constant 0 : i32
    return %arg0, %c0_i32 : i32, i32
  }
}

</mosaic_0001>

<llo_original>
// kernel: tpu_custom_call.1
$region0: #{tpu_custom_call.1}
  #allocation0 [shape = 'u32[]', space=smem, size = 0x4, offset = 0x4, fixed_abs, tag = 'smem constant byte address 0x4 - core index']
  #allocation1 [shape = 'u32[144,128]{1,0:T(1,128)}', space=vmem, size = 0x12000, scoped, tag = 'internal scratch']
  #allocation2 [shape = 'f32[1,2,8]{2,1,0:T(2,128)}', space=vmem, size = 0x400, scoped, tag = 'scratch operand']
  %s0 = inlined_call_operand.hbm [shape: f32[2,32], index: 0, kind: input, shape index: {}]
  %s1 = inlined_call_operand.hbm [shape: f32[8,2,32], index: 1, kind: input, shape index: {}]
  %s2 = inlined_call_operand.hbm [shape: f32[2,8], index: 2, kind: output, shape index: {}]
  %s3 = sld [smem:[#allocation0]]
  $region30: #{tpu_custom_call.1} parent=0
    _
  %s5 = ssub.s32 1, %s3
  %s6 = scalar_select 0, %s5, %s3
  $region1: #{tpu_custom_call.1} parent=0
    #allocation3 [shape = 'u8[1024]{0}', space=vmem, size = 0x400, scoped, tag = 'input window, operand 0, single buffered']
    #allocation4 [shape = 's32[1]{0}', space=sflag, size = 0x4, scoped, tag = 'scoped memory for tpu_custom_call.1']
    #allocation5 [shape = 's32[1]{0}', space=sflag, size = 0x4, scoped, tag = 'scoped memory for tpu_custom_call.1']
    #allocation6 [shape = 'u8[8192]{0}', space=vmem, size = 0x2000, scoped, tag = 'input window, operand 1, single buffered']
    #allocation7 [shape = 's32[1]{0}', space=sflag, size = 0x4, scoped, tag = 'scoped memory for tpu_custom_call.1']
    #allocation8 [shape = 'u8[1024]{0}', space=vmem, size = 0x400, scoped, tag = 'output window, operand 0, single buffered']
    %7 = vsyncpa [#allocation4], 0
    %8 = vsyncpa [#allocation7], 0
    %9 = vsyncpa [#allocation5], 0
    // Predicated region
    $region2: #{tpu_custom_call.1} parent=1 // pred_check
      _
    $region3: #{tpu_custom_call.1} parent=1 // pred_check_branch
      %11 = sbr.rel (0) target = $region5
    $region4: #{tpu_custom_call.1} parent=1 // pred_region
      %s13 = ssub.s32 32, 32
      %14 = vsyncadd [#allocation4], %s13
      %s16 = sshll.u32 [#allocation3], 4
      %s17 = int_to_ptr.vmem [resolvable:$true] %s16
      %19 = dma.hbm_to_vmem [thread:$0]  %s0, 32, %s17, [#allocation4]
    $region5: #{tpu_custom_call.1} parent=1 // pred_fallthru
      _
    // Predicated region
    $region6: #{tpu_custom_call.1} parent=1 // pred_check
      _
    $region7: #{tpu_custom_call.1} parent=1 // pred_check_branch
      %21 = sbr.rel (0) target = $region9
    $region8: #{tpu_custom_call.1} parent=1 // pred_region
      %s23 = ssub.s32 256, 256
      %24 = vsyncadd [#allocation7], %s23
      %s25 = sshll.u32 [#allocation6], 4
      %s26 = int_to_ptr.vmem [resolvable:$true] %s25
      %31 = dma.hbm_to_vmem [thread:$0]  %s1, 256, %s26, [#allocation7], 32, 32, 2
    $region9: #{tpu_custom_call.1} parent=1 // pred_fallthru
      _
    // Predicated region
    $region10: #{tpu_custom_call.1} parent=1 // pred_check
      _
    $region11: #{tpu_custom_call.1} parent=1 // pred_check_branch
      %33 = sbr.rel (0) target = $region13
    $region12: #{tpu_custom_call.1} parent=1 // pred_region
      %34 = dma.done [#allocation4], 32
    $region13: #{tpu_custom_call.1} parent=1 // pred_fallthru
      _
    // Predicated region
    $region14: #{tpu_custom_call.1} parent=1 // pred_check
      _
    $region15: #{tpu_custom_call.1} parent=1 // pred_check_branch
      %36 = sbr.rel (0) target = $region17
    $region16: #{tpu_custom_call.1} parent=1 // pred_region
      %37 = dma.done [#allocation7], 256
    $region17: #{tpu_custom_call.1} parent=1 // pred_fallthru
      _
    %v38 = vld [vmem:[#allocation3] sm:$0x3]
    %v39 = vld [vmem:[#allocation6] sm:$0x3]
    %v40 = vld [vmem:[#allocation6 + $0x2] sm:$0x3]
    %v41 = vld [vmem:[#allocation6 + $0x4] sm:$0x3]
    %v42 = vld [vmem:[#allocation6 + $0x6] sm:$0x3]
    %v43 = vld [vmem:[#allocation6 + $0x8] sm:$0x3]
    %v44 = vld [vmem:[#allocation6 + $0xa] sm:$0x3]
    %v45 = vld [vmem:[#allocation6 + $0xc] sm:$0x3]
    %v46 = vld [vmem:[#allocation6 + $0xe] sm:$0x3]
    %v47 = vmul.f32 %v39, %v38
    %v48 = vmul.f32 %v40, %v38
    %v49 = vmul.f32 %v41, %v38
    %v50 = vmul.f32 %v42, %v38
    %v51 = vmul.f32 %v43, %v38
    %v52 = vmul.f32 %v44, %v38
    %v53 = vmul.f32 %v45, %v38
    %v54 = vmul.f32 %v46, %v38
    %vm55 = vcmask 254976
    %v56 = vsel %vm55, %v47, 0.0
    %57 = vadd.xlane.f32.xlu0 %v56
    %v58 = vpop.xlane.xlu0 %57
    %v59 = vsel %vm55, %v48, 0.0
    %60 = vadd.xlane.f32.xlu0 %v59
    %v61 = vpop.xlane.xlu0 %60
    %v62 = vsel %vm55, %v49, 0.0
    %63 = vadd.xlane.f32.xlu0 %v62
    %v64 = vpop.xlane.xlu0 %63
    %v65 = vsel %vm55, %v50, 0.0
    %66 = vadd.xlane.f32.xlu0 %v65
    %v67 = vpop.xlane.xlu0 %66
    %v68 = vsel %vm55, %v51, 0.0
    %69 = vadd.xlane.f32.xlu0 %v68
    %v70 = vpop.xlane.xlu0 %69
    %v71 = vsel %vm55, %v52, 0.0
    %72 = vadd.xlane.f32.xlu0 %v71
    %v73 = vpop.xlane.xlu0 %72
    %v74 = vsel %vm55, %v53, 0.0
    %75 = vadd.xlane.f32.xlu0 %v74
    %v76 = vpop.xlane.xlu0 %75
    %v77 = vsel %vm55, %v54, 0.0
    %78 = vadd.xlane.f32.xlu0 %v77
    %v79 = vpop.xlane.xlu0 %78
    %v88 = vlaneseq
    %v89 = vand.u32 %v88, 127
    %v90 = vlaneseq
    %v91 = vshrl.u32 %v90, 7
    %v92 = vsub.s32 %v89, %v91
    %v93 = vrot.slane %v58, %v92
    %v94 = vlaneseq
    %v95 = vshrl.u32 %v94, 7
    %v96 = vsub.s32 %v89, %v95
    %v97 = vrot.slane %v61, %v96
    %v98 = vlaneseq
    %v99 = vshrl.u32 %v98, 7
    %v100 = vsub.s32 %v89, %v99
    %v101 = vrot.slane %v64, %v100
    %v102 = vlaneseq
    %v103 = vshrl.u32 %v102, 7
    %v104 = vsub.s32 %v89, %v103
    %v105 = vrot.slane %v67, %v104
    %v106 = vlaneseq
    %v107 = vshrl.u32 %v106, 7
    %v108 = vsub.s32 %v89, %v107
    %v109 = vrot.slane %v70, %v108
    %v110 = vlaneseq
    %v111 = vshrl.u32 %v110, 7
    %v112 = vsub.s32 %v89, %v111
    %v113 = vrot.slane %v73, %v112
    %v114 = vlaneseq
    %v115 = vshrl.u32 %v114, 7
    %v116 = vsub.s32 %v89, %v115
    %v117 = vrot.slane %v76, %v116
    %v118 = vlaneseq
    %v119 = vshrl.u32 %v118, 7
    %v120 = vsub.s32 %v89, %v119
    %v121 = vrot.slane %v79, %v120
    %vm122 = vcmask 1041409
    %v123 = vsel %vm122, %v97, %v93
    %vm124 = vcmask 1042434
    %v125 = vsel %vm124, %v101, %v123
    %vm126 = vcmask 1043459
    %v127 = vsel %vm126, %v105, %v125
    %vm128 = vcmask 1044484
    %v129 = vsel %vm128, %v109, %v127
    %vm130 = vcmask 1045509
    %v131 = vsel %vm130, %v113, %v129
    %vm132 = vcmask 1046534
    %v133 = vsel %vm132, %v117, %v131
    %vm134 = vcmask 1047559
    %v135 = vsel %vm134, %v121, %v133
    %137 = vxpose.xlu0.b32.start [1/16] %v135, 128
    %138 = vxpose.xlu0.b32.cont [2/16] 0.0, 128
    %139 = vxpose.xlu0.b32.cont [3/16] 0.0, 128
    %140 = vxpose.xlu0.b32.cont [4/16] 0.0, 128
    %141 = vxpose.xlu0.b32.cont [5/16] 0.0, 128
    %142 = vxpose.xlu0.b32.cont [6/16] 0.0, 128
    %143 = vxpose.xlu0.b32.cont [7/16] 0.0, 128
    %144 = vxpose.xlu0.b32.cont [8/16] 0.0, 128
    %145 = vxpose.xlu0.b32.cont [9/16] 0.0, 128
    %146 = vxpose.xlu0.b32.cont [10/16] 0.0, 128
    %147 = vxpose.xlu0.b32.cont [11/16] 0.0, 128
    %148 = vxpose.xlu0.b32.cont [12/16] 0.0, 128
    %149 = vxpose.xlu0.b32.cont [13/16] 0.0, 128
    %150 = vxpose.xlu0.b32.cont [14/16] 0.0, 128
    %151 = vxpose.xlu0.b32.cont [15/16] 0.0, 128
    %152 = vxpose.xlu0.b32.end [16/16] 0.0, 128
    %v153 = vpop.trf.xlu0
    %v154 = vpop.trf.xlu0
    %v155 = vpop.trf.xlu0
    %v156 = vpop.trf.xlu0
    %v157 = vpop.trf.xlu0
    %v158 = vpop.trf.xlu0
    %v159 = vpop.trf.xlu0
    %v160 = vpop.trf.xlu0
    %v161 = vpop.trf.xlu0
    %v162 = vpop.trf.xlu0
    %v163 = vpop.trf.xlu0
    %v164 = vpop.trf.xlu0
    %v165 = vpop.trf.xlu0
    %v166 = vpop.trf.xlu0
    %v167 = vpop.trf.xlu0
    %v168 = vpop.trf.xlu0
    %s169 = smul.u32 0, 2
    %s170 = scalar_lea.vmem [#allocation2], %s169
    %vm171 = vcmask 58368
    %172 = vst.msk [vmem:[%s170] sm:$0x3] %vm171, %v153
    %p173 = scmp.eq.s32.totalorder 0, 0
    // Predicated region
    $region18: #{tpu_custom_call.1} parent=1 // pred_check
      %p174 = pneg %p173
    $region19: #{tpu_custom_call.1} parent=1 // pred_check_branch
      %176 = sbr.rel (%p174) target = $region21
    $region20: #{tpu_custom_call.1} parent=1 // pred_region
      %v177 = vld [vmem:[#allocation2] sm:$0x3]
      %v178 = vsel %vm171, %v177, -inf
      %179 = vmax.xlane.f32.xlu0 %v178
      %v180 = vpop.xlane.xlu0 %179
      %v181 = vsub.f32 %v177, %v180
      %v182 = vmul.f32 %v181, 1.442695
      %v183 = vpow.pop %v182
      %v184 = vsel %vm171, %v183, 0.0
      %185 = vadd.xlane.f32.xlu0 %v184
      %v186 = vpop.xlane.xlu0 %185
      %v187 = vrcp.pop %v186
      %v188 = vmul.f32 %v183, %v187
      %189 = vst.msk [vmem:[#allocation8] sm:$0x3] %vm171, %v188
    $region21: #{tpu_custom_call.1} parent=1 // pred_fallthru
      _
    // Predicated region
    $region22: #{tpu_custom_call.1} parent=1 // pred_check
      _
    $region23: #{tpu_custom_call.1} parent=1 // pred_check_branch
      %191 = sbr.rel (0) target = $region25
    $region24: #{tpu_custom_call.1} parent=1 // pred_region
      %s193 = ssub.s32 32, 32
      %194 = vsyncadd [#allocation5], %s193
      %s196 = sshll.u32 [#allocation8], 4
      %s197 = int_to_ptr.vmem [resolvable:$true] %s196
      %199 = dma.vmem_to_hbm [thread:$0]  %s197, 32, %s2, [#allocation5]
    $region25: #{tpu_custom_call.1} parent=1 // pred_fallthru
      _
    // Predicated region
    $region26: #{tpu_custom_call.1} parent=1 // pred_check
      _
    $region27: #{tpu_custom_call.1} parent=1 // pred_check_branch
      %201 = sbr.rel (0) target = $region29
    $region28: #{tpu_custom_call.1} parent=1 // pred_region
      %202 = dma.done [#allocation5], 32
    $region29: #{tpu_custom_call.1} parent=1 // pred_fallthru
      _
    %203 = vsyncpa [#allocation4], 1
    %204 = vsyncpa [#allocation7], 1
    %205 = vsyncpa [#allocation5], 1

</llo_original>
